<compile_context>
chip_gen: v6e
topology: v6e:2x2x1
jax: 0.10.0
libtpu: 0.0.40
codegen_flags: <defaults>
</compile_context>

<pallas_src>
import jax
import jax.numpy as jnp
from jax.experimental import pallas as pl
from jax.experimental.pallas import tpu as pltpu


def _identity_kernel(x_ref, o_ref):
    # Pure identity: one VMEM load + one VMEM store per tile.
    o_ref[...] = x_ref[...]


@jax.jit
def nothing_forward(x):
    """Pallas implementation of Nothing.forward(x) -> x (identity copy)."""
    orig_shape = x.shape
    dtype = x.dtype
    itemsize = jnp.dtype(dtype).itemsize
    total = x.size

    if total == 0:
        return x

    # Pure mem-bound op: tell XLA's scheduler there are no flops, just bytes.
    cost = pl.CostEstimate(
        flops=0, transcendentals=0, bytes_accessed=2 * total * itemsize
    )

    # Pick a lane-dense column width (multiple of 128) that divides the flat
    # size exactly, so the 2D view is a free reshape and no padding is needed.
    cols = None
    for cand in (4096, 2048, 1024, 512, 256, 128):
        if total % cand == 0:
            cols = cand
            break

    if cols is None:
        # Ragged flat size: copy the whole array as a single block
        # (block == full array dims, so the (8,128) rule is satisfied).
        # TODO(synk): a very large ragged input could exceed VMEM as a single
        # block; such shapes are not produced by this module's users.
        x2d = x.reshape(1, total)
        out2d = pl.pallas_call(
            _identity_kernel,
            out_shape=jax.ShapeDtypeStruct((1, total), dtype),
            grid=(1,),
            in_specs=[pl.BlockSpec((1, total), lambda i: (0, 0))],
            out_specs=pl.BlockSpec((1, total), lambda i: (0, 0)),
            input_output_aliases={0: 0},
            cost_estimate=cost,
        )(x2d)
        return out2d.reshape(orig_shape)

    rows = total // cols
    x2d = x.reshape(rows, cols)  # contiguous reshape -> bitcast under jit

    # Dtype-aware sublane block: multiple of 32 covers f32 (8), bf16 (16),
    # int8/fp8 (32) minimum tiles. Target ~2 MiB per block.
    SUB = 32
    target_block_bytes = 2 * 1024 * 1024
    block_rows = max(SUB, (target_block_bytes // (cols * itemsize)) // SUB * SUB)
    if block_rows >= rows:
        block_rows = rows  # whole slab fits in one block (block == full dim)
    grid = (pl.cdiv(rows, block_rows),)  # ragged tail handled by partial block

    out2d = pl.pallas_call(
        _identity_kernel,
        out_shape=jax.ShapeDtypeStruct((rows, cols), dtype),
        grid=grid,
        in_specs=[pl.BlockSpec((block_rows, cols), lambda i: (i, 0))],
        out_specs=pl.BlockSpec((block_rows, cols), lambda i: (i, 0)),
        input_output_aliases={0: 0},
        cost_estimate=cost,
        compiler_params=pltpu.CompilerParams(
            dimension_semantics=("parallel",),
        ),
    )(x2d)
    return out2d.reshape(orig_shape)


if __name__ == "__main__":
    key = jax.random.PRNGKey(0)
    x = jax.random.normal(key, (2, 4, 16, 16), dtype=jnp.float32)

    y = nothing_forward(x)
    y = jax.block_until_ready(y)

    assert y.shape == x.shape and y.dtype == x.dtype
    assert bool(jnp.allclose(y, x)), "identity kernel mismatch"
    print("KERNEL_OK")
</pallas_src>

<mosaic_0001>
module attributes {stable_mosaic.version = 11 : i64} {
  func.func @_identity_kernel(%arg0: i32, %arg1: memref<1x2048xf32, #tpu.memory_space<vmem>>, %arg2: memref<1x2048xf32, #tpu.memory_space<vmem>>) attributes {dimension_semantics = [#tpu.dimension_semantics<parallel>], iteration_bounds = array<i64: 1>, scalar_prefetch = 0 : i64, scratch_operands = 0 : i64, tpu.core_type = #tpu.core_type<tc>, window_params = [{transform_indices = @transform_0, window_bounds = array<i64: 1, 2048>}, {transform_indices = @transform_1, window_bounds = array<i64: 1, 2048>}]} {
    %c0 = arith.constant 0 : index
    %c0_0 = arith.constant 0 : index
    %0 = vector.load %arg1[%c0, %c0_0] : memref<1x2048xf32, #tpu.memory_space<vmem>>, vector<1x2048xf32>
    %c0_1 = arith.constant 0 : index
    %c0_2 = arith.constant 0 : index
    %1 = vector.load %arg2[%c0_1, %c0_2] : memref<1x2048xf32, #tpu.memory_space<vmem>>, vector<1x2048xf32>
    tpu.vector_store %arg2[%c0_1, %c0_2], %0 {strides = array<i32>} : memref<1x2048xf32, #tpu.memory_space<vmem>>, vector<1x2048xf32>,
    return
  }
  func.func @transform_0(%arg0: i32) -> (i32, i32) {
    %c0_i32 = arith.constant 0 : i32
    %c0_i32_0 = arith.constant 0 : i32
    return %arg0, %c0_i32 : i32, i32
  }
  func.func @transform_1(%arg0: i32) -> (i32, i32) {
    %c0_i32 = arith.constant 0 : i32
    %c0_i32_0 = arith.constant 0 : i32
    return %arg0, %c0_i32 : i32, i32
  }
}

</mosaic_0001>

<llo_original>
// kernel: nothing_forward.1
$region0: #{nothing_forward.1}
  #allocation0 [shape = 'u32[]', space=smem, size = 0x4, offset = 0x4, fixed_abs, tag = 'smem constant byte address 0x4 - core index']
  #allocation1 [shape = 'u32[144,128]{1,0:T(1,128)}', space=vmem, size = 0x12000, scoped, tag = 'internal scratch']
  %s0 = inlined_call_operand.vmem [shape: f32[1,2048], index: 0, kind: input, shape index: {}, may-alias: {0,1}]
  %s1 = inlined_call_operand.vmem [shape: f32[1,2048], index: 1, kind: output, shape index: {}, may-alias: {0,1}]
  %s2 = sld [smem:[#allocation0]]
  $region14: #{nothing_forward.1} parent=0
    _
  %s4 = ssub.s32 1, %s2
  %s5 = scalar_select 0, %s4, %s2
  // Predicated region
  $region2: #{nothing_forward.1} parent=0 // pred_check
    _
  $region3: #{nothing_forward.1} parent=0 // pred_check_branch
    %7 = sbr.rel (0) target = $region5
  $region4: #{nothing_forward.1} parent=0 // pred_region
    _
  $region5: #{nothing_forward.1} parent=0 // pred_fallthru
    _
  %v8 = vld [vmem:[%s0] sm:$0xff]
  %v9 = vld [vmem:[%s0 + $0x8] sm:$0xff]
  %10 = vst [vmem:[%s1] sm:$0xff] %v8
  %11 = vst [vmem:[%s1 + $0x8] sm:$0xff] %v9
  // Predicated region
  $region6: #{nothing_forward.1} parent=0 // pred_check
    _
  $region7: #{nothing_forward.1} parent=0 // pred_check_branch
    %13 = sbr.rel (0) target = $region9
  $region8: #{nothing_forward.1} parent=0 // pred_region
    _
  $region9: #{nothing_forward.1} parent=0 // pred_fallthru
    _
  // Predicated region
  $region10: #{nothing_forward.1} parent=0 // pred_check
    _
  $region11: #{nothing_forward.1} parent=0 // pred_check_branch
    %15 = sbr.rel (0) target = $region13
  $region12: #{nothing_forward.1} parent=0 // pred_region
    _
  $region13: #{nothing_forward.1} parent=0 // pred_fallthru
    _

</llo_original>
